<compile_context>
chip_gen: v7x
topology: tpu7x:2x2x1
jax: 0.10.0
libtpu: 0.0.40
codegen_flags: <defaults>
</compile_context>

<pallas_src>
import functools

import numpy as np
import jax
import jax.numpy as jnp
from jax.experimental import pallas as pl
from jax.experimental.pallas import tpu as pltpu


# ------------------------------ Pallas kernel -------------------------------

def _maxpool3d_kernel(x_ref, s_ref, o_ref, *, hw, we, fold):
    """x_ref: (tb, fold*2*hw) native dtype; s_ref: one-hot f32; o_ref: native dtype."""
    # Pool math runs in f32 on the VMEM-resident block: the upcast is cheap VPU
    # work hidden under the block DMA and HBM traffic stays in the native dtype.
    # TODO(synk): keep bf16 blocks in bf16 end-to-end once packed-lane pltpu.roll
    # support is confirmed on all target generations.
    x = x_ref[...].astype(jnp.float32)
    if fold == 1:
        # Depth pool: the two d-planes are the two aligned hw-wide lane halves.
        xd = jnp.maximum(x[:, :hw], x[:, hw:])
    else:
        # Folded groups: the depth partner sits hw lanes to the right inside each
        # 2*hw group.  Cyclic wrap-around garbage only lands on lanes that are
        # never selected by the one-hot matrix S.
        xd = jnp.maximum(x, pltpu.roll(x, x.shape[1] - hw, 1))
    lanes = xd.shape[1]
    # Width pool (pairs (w, w+1)) and height pool (pairs (h, h+1)).  Non-negative
    # XLU lane rotations, equivalent to rolls by -1 / -We.
    xw = jnp.maximum(xd, pltpu.roll(xd, lanes - 1, 1))
    xh = jnp.maximum(xw, pltpu.roll(xw, lanes - we, 1))
    # Compact the Ho*Wo window maxima into a lane-dense output row with a one-hot
    # selection matmul on the otherwise-idle MXU (f32 accumulation -> exact pick).
    acc = jnp.dot(xh, s_ref[...], preferred_element_type=jnp.float32)
    o_ref[...] = acc.astype(o_ref.dtype)


# ------------------------------ tiling helpers --------------------------------

def _pick_fold(G, hw, how_wo):
    """Fold k consecutive (n,c,do) groups into one row so the output row width
    (k*Ho*Wo) is lane-dense (a multiple of 128) when Ho*Wo alone is not."""
    if how_wo % 128 == 0:
        return 1

    def s_ok(k):  # keep the one-hot matrix small (f32)
        return (k * 2 * hw) * (k * how_wo) * 4 <= (2 << 20)

    kmax = min(G, 256)
    for k in range(2, kmax + 1):
        if G % k == 0 and s_ok(k) and (k * how_wo) % 128 == 0:
            return k
    if how_wo < 128:
        for k in range(2, kmax + 1):
            if G % k == 0 and s_ok(k) and k * how_wo >= 128:
                return k
    return 1


def _pick_tb(n_rows, lane_in, lane_out, io_itemsize, s_bytes):
    """Row-block size from a VMEM budget (multi-MiB blocks amortize the ~0.35us
    per-step pipeline overhead), capped so the grid keeps >= 2 steps."""
    # double-buffered in/out blocks + f32 in-kernel temporaries, per block row
    per_row = 2 * (lane_in + lane_out) * io_itemsize + 3 * lane_in * 4
    budget = max(4 << 20, (16 << 20) - 2 * s_bytes)
    tb = max(1, budget // per_row)
    if n_rows >= 16:                       # keep >= 2 grid steps (v7x megacore)
        tb = min(tb, -(-n_rows // 2))
    tb = min(tb, n_rows)
    if tb < n_rows:
        mult = 8 if io_itemsize >= 4 else 16   # sublane-friendly block rows
        tb = max(mult, (tb // mult) * mult)
        tb = min(tb, n_rows)
    return tb


# ------------------------------ wrapper ----------------------------------------

def maxpool3d_2x2x2(x):
    """MaxPool3d(kernel_size=2, stride=2) on an NCDHW tensor (one fused kernel)."""
    orig_dtype = x.dtype
    if not jnp.issubdtype(orig_dtype, jnp.floating):
        # TODO(synk): add a dedicated integer path (f32 round-trip is unsafe > 2^24).
        raise NotImplementedError("maxpool3d_2x2x2 supports floating dtypes only")
    if orig_dtype == jnp.float32 or orig_dtype == jnp.bfloat16:
        cdt = orig_dtype                    # native I/O dtype: one HBM read + write
    else:
        cdt = jnp.float32                   # e.g. float16 fallback
        x = x.astype(cdt)

    N, C, D, H, W = x.shape
    Do, Ho, Wo = D // 2, H // 2, W // 2
    assert Do >= 1 and Ho >= 1 and Wo >= 1, "all spatial dims must be >= 2"
    if (D, H, W) != (2 * Do, 2 * Ho, 2 * Wo):       # PyTorch floor behaviour
        x = x[:, :, :2 * Do, :2 * Ho, :2 * Wo]       # (copy only for odd dims)
    He, We = 2 * Ho, 2 * Wo
    hw = He * We
    how_wo = Ho * Wo
    G = N * C * Do
    io_itemsize = np.dtype(cdt).itemsize

    fold = _pick_fold(G, hw, how_wo)
    n_rows = G // fold
    lane_in = fold * 2 * hw
    lane_out = fold * how_wo

    # One-hot compaction matrix (trace-time constant; fetched once, stays resident).
    s_rows = hw if fold == 1 else lane_in
    s_bytes = s_rows * lane_out * 4
    if s_bytes > (6 << 20):
        # TODO(synk): tile the compaction matmul over lane chunks for very large H*W.
        raise NotImplementedError("H*W too large for the single-shot compaction matrix")
    ho = np.arange(Ho)[:, None]
    wo = np.arange(Wo)[None, :]
    sel = (2 * We * ho + 2 * wo).reshape(-1)          # lanes holding window maxima
    S_np = np.zeros((s_rows, lane_out), dtype=np.float32)
    for g in range(fold):
        base = 0 if fold == 1 else g * 2 * hw
        S_np[base + sel, g * how_wo + np.arange(how_wo)] = 1.0
    S = jnp.asarray(S_np)

    x2 = x.reshape(n_rows, lane_in)                   # free reshape (row-major)

    tb = _pick_tb(n_rows, lane_in, lane_out, io_itemsize, s_bytes)
    grid = (pl.cdiv(n_rows, tb),)

    kernel = functools.partial(_maxpool3d_kernel, hw=hw, we=We, fold=fold)
    out2 = pl.pallas_call(
        kernel,
        out_shape=jax.ShapeDtypeStruct((n_rows, lane_out), cdt),
        grid=grid,
        in_specs=[
            pl.BlockSpec((tb, lane_in), lambda i: (i, 0)),
            pl.BlockSpec((s_rows, lane_out), lambda i: (0, 0)),   # resident constant
        ],
        out_specs=pl.BlockSpec((tb, lane_out), lambda i: (i, 0)),
        compiler_params=pltpu.CompilerParams(
            dimension_semantics=("parallel",),
            vmem_limit_bytes=32 * 1024 * 1024,
        ),
    )(x2, S)

    out = out2.reshape(N, C, Do, Ho, Wo)              # free reshape back
    if out.dtype != orig_dtype:
        out = out.astype(orig_dtype)
    return out


# --------------------------- pure-JAX reference ---------------------------------

def ref_maxpool3d(x):
    N, C, D, H, W = x.shape
    Do, Ho, Wo = D // 2, H // 2, W // 2
    xe = x[:, :, :2 * Do, :2 * Ho, :2 * Wo]
    return xe.reshape(N, C, Do, 2, Ho, 2, Wo, 2).max(axis=(3, 5, 7))


# ---------------------------------- main ----------------------------------------

if __name__ == "__main__":
    key = jax.random.PRNGKey(0)
    fwd = jax.jit(maxpool3d_2x2x2)

    # 1) f32, Ho*Wo = 128 (lane-dense output), two-step parallel grid.
    N, C, D, H, W = 2, 4, 16, 16, 32
    x = jax.random.normal(key, (N, C, D, H, W), jnp.float32)
    out = jax.block_until_ready(fwd(x))
    ref = ref_maxpool3d(x)
    assert out.shape == (N, C, D // 2, H // 2, W // 2) and out.dtype == x.dtype
    # Selection is exact up to (at worst) one bf16 rounding inside the MXU pass.
    assert jnp.allclose(out, ref, rtol=4e-3, atol=1e-6), float(jnp.max(jnp.abs(out - ref)))

    # 2) bf16 native-dtype path (no up/down-cast HBM passes): must be bit-exact.
    xb = x.astype(jnp.bfloat16)
    outb = jax.block_until_ready(fwd(xb))
    assert outb.dtype == jnp.bfloat16
    assert bool(jnp.all(outb == ref_maxpool3d(xb)))

    # 3) small Ho*Wo: groups folded into the lane axis for a lane-dense output.
    xf = jax.random.normal(jax.random.PRNGKey(1), (2, 4, 8, 8, 8), jnp.float32)
    outf = jax.block_until_ready(fwd(xf))
    assert jnp.allclose(outf, ref_maxpool3d(xf), rtol=4e-3, atol=1e-6)

    print("KERNEL_OK")
</pallas_src>

<mosaic_0001>
module attributes {stable_mosaic.version = 11 : i64} {
  func.func @_maxpool3d_kernel(%arg0: i32, %arg1: memref<32x1024xf32, #tpu.memory_space<vmem>>, %arg2: memref<512x128xf32, #tpu.memory_space<vmem>>, %arg3: memref<32x128xf32, #tpu.memory_space<vmem>>) attributes {dimension_semantics = [#tpu.dimension_semantics<parallel>], iteration_bounds = array<i64: 2>, scalar_prefetch = 0 : i64, scratch_operands = 0 : i64, tpu.core_type = #tpu.core_type<tc>, window_params = [{transform_indices = @transform_0, window_bounds = array<i64: 32, 1024>}, {pipeline_mode = #tpu.pipeline_mode<synchronous>, transform_indices = @transform_1, window_bounds = array<i64: 512, 128>}, {transform_indices = @transform_2, window_bounds = array<i64: 32, 128>}]} {
    %c0 = arith.constant 0 : index
    %c0_0 = arith.constant 0 : index
    %0 = vector.load %arg1[%c0, %c0_0] : memref<32x1024xf32, #tpu.memory_space<vmem>>, vector<32x1024xf32>
    %1 = vector.extract_strided_slice %0 {offsets = [0, 0], sizes = [32, 512], strides = [1, 1]} : vector<32x1024xf32> to vector<32x512xf32>
    %2 = vector.extract_strided_slice %0 {offsets = [0, 512], sizes = [32, 512], strides = [1, 1]} : vector<32x1024xf32> to vector<32x512xf32>
    %3 = arith.maximumf %1, %2 : vector<32x512xf32>
    %c511_i32 = arith.constant 511 : i32
    %4 = tpu.dynamic_rotate %3 by %c511_i32 dim 1 : vector<32x512xf32>, i32 -> vector<32x512xf32>
    %5 = arith.maximumf %3, %4 : vector<32x512xf32>
    %c480_i32 = arith.constant 480 : i32
    %6 = tpu.dynamic_rotate %5 by %c480_i32 dim 1 : vector<32x512xf32>, i32 -> vector<32x512xf32>
    %7 = arith.maximumf %5, %6 : vector<32x512xf32>
    %c0_1 = arith.constant 0 : index
    %c0_2 = arith.constant 0 : index
    %8 = vector.load %arg2[%c0_1, %c0_2] : memref<512x128xf32, #tpu.memory_space<vmem>>, vector<512x128xf32>
    %cst = arith.constant dense<0.000000e+00> : vector<32x128xf32>
    %9 = tpu.matmul %7, %8, %cst {dimension_numbers = #tpu.dot_dimension_numbers<[1], [0], [0], [1], [0, 0, 1, 1], [], []>} : vector<32x512xf32>, vector<512x128xf32>, vector<32x128xf32> -> vector<32x128xf32>
    %c0_3 = arith.constant 0 : index
    %c0_4 = arith.constant 0 : index
    %10 = vector.load %arg3[%c0_3, %c0_4] : memref<32x128xf32, #tpu.memory_space<vmem>>, vector<32x128xf32>
    tpu.vector_store %arg3[%c0_3, %c0_4], %9 {strides = array<i32>} : memref<32x128xf32, #tpu.memory_space<vmem>>, vector<32x128xf32>,
    return
  }
  func.func @transform_0(%arg0: i32) -> (i32, i32) {
    %c0_i32 = arith.constant 0 : i32
    %c0_i32_0 = arith.constant 0 : i32
    return %arg0, %c0_i32 : i32, i32
  }
  func.func @transform_1(%arg0: i32) -> (i32, i32) {
    %c0_i32 = arith.constant 0 : i32
    %c0_i32_0 = arith.constant 0 : i32
    %c0_i32_1 = arith.constant 0 : i32
    return %c0_i32, %c0_i32_0 : i32, i32
  }
  func.func @transform_2(%arg0: i32) -> (i32, i32) {
    %c0_i32 = arith.constant 0 : i32
    %c0_i32_0 = arith.constant 0 : i32
    return %arg0, %c0_i32 : i32, i32
  }
}

</mosaic_0001>

<llo_original>
// kernel: maxpool3d_2x2x2.1
$region0: #{maxpool3d_2x2x2.1}
  #allocation0 [shape = 'u32[]', space=smem, size = 0x4, offset = 0x4, fixed_abs, tag = 'smem constant byte address 0x4 - core index']
  #allocation1 [shape = 'u32[144,128]{1,0:T(1,128)}', space=vmem, size = 0x12000, scoped, tag = 'internal scratch']
  %s0 = inlined_call_operand.vmem [shape: f32[64,1024], index: 0, kind: input, shape index: {}]
  %s1 = inlined_call_operand.vmem [shape: f32[512,128], index: 1, kind: input, shape index: {}]
  %s2 = inlined_call_operand.vmem [shape: f32[64,128], index: 2, kind: output, shape index: {}]
  %s3 = sld [smem:[#allocation0]]
  $region41: #{maxpool3d_2x2x2.1} parent=0
    _
  %s5 = ssub.s32 1, %s3
  %s6 = scalar_select 0, %s5, %s3
  loop: start=0, step=1, limit=4
  $region2: #{maxpool3d_2x2x2.1} parent=0 // loop_pre_header
    _
  $region3: #{maxpool3d_2x2x2.1} parent=0 // loop_header
    %s8 = sphi 0, %s12
    %p9 = scmp.ge.s32.totalorder %s8, 4
    %s18 = sphi 0, %s20
    %s21 = sphi 0, %s18
    %s22 = sphi 0, %s21
    %s38 = sphi 0, %s22
    %s42 = sphi 0, %s42
    %s44 = sphi 0, %s42
    %s45 = sphi 0, %s44
    %s59 = sphi 0, %s45
    %s65 = sphi 0, %s67
    %s68 = sphi 0, %s65
    %s69 = sphi 0, %s68
    %s85 = sphi 0, %s69
  $region4: #{maxpool3d_2x2x2.1} parent=0 // loop_header_branch
    %11 = sbr.rel (%p9) target = $region8
  $region5: #{maxpool3d_2x2x2.1} parent=0 // loop_body
    %s13 = ssub.s32 %s8, 1
    %s14 = ssub.s32 %s8, 2
    %s15 = sadd.s32 %s8, 1
    %s16 = ssub.s32 %s8, %s15
    %p17 = scmp.eq.s32.totalorder %s16, 0
    %s19 = sadd.s32 %s18, 1
    %s20 = scalar_select %p17, %s18, %s19
    %p23 = pneg %p17
    %p24 = scmp.eq.s32.totalorder %s8, 1
    %p25 = por %p23, %p24
    %p26 = scmp.ne.s32.totalorder %s18, %s21
    %p27 = scmp.eq.s32.totalorder %s8, 0
    %p28 = por %p26, %p27
    %p29 = scmp.ne.s32.totalorder %s18, %s21
    %p30 = scmp.eq.s32.totalorder %s13, 1
    %p31 = por %p29, %p30
    %p32 = scmp.ne.s32.totalorder %s21, %s22
    %p33 = scmp.eq.s32.totalorder %s13, 0
    %p34 = por %p32, %p33
    %p35 = scmp.ne.s32.totalorder %s21, %s22
    %p36 = scmp.eq.s32.totalorder %s14, 1
    %p37 = por %p35, %p36
    %p39 = scmp.ne.s32.totalorder %s22, %s38
    %p40 = scmp.eq.s32.totalorder %s14, 0
    %p41 = por %p39, %p40
    %s43 = sadd.s32 %s42, 1
    %p46 = scmp.eq.s32.totalorder %s8, 1
    %p47 = scmp.ne.s32.totalorder %s42, %s44
    %p48 = scmp.eq.s32.totalorder %s8, 0
    %p49 = por %p47, %p48
    %p50 = scmp.ne.s32.totalorder %s42, %s44
    %p51 = scmp.eq.s32.totalorder %s13, 1
    %p52 = por %p50, %p51
    %p53 = scmp.ne.s32.totalorder %s44, %s45
    %p54 = scmp.eq.s32.totalorder %s13, 0
    %p55 = por %p53, %p54
    %p56 = scmp.ne.s32.totalorder %s44, %s45
    %p57 = scmp.eq.s32.totalorder %s14, 1
    %p58 = por %p56, %p57
    %p60 = scmp.ne.s32.totalorder %s45, %s59
    %p61 = scmp.eq.s32.totalorder %s14, 0
    %p62 = por %p60, %p61
    %s63 = ssub.s32 %s8, %s15
    %p64 = scmp.eq.s32.totalorder %s63, 0
    %s66 = sadd.s32 %s65, 1
    %s67 = scalar_select %p64, %s65, %s66
    %p70 = pneg %p64
    %p71 = scmp.eq.s32.totalorder %s8, 1
    %p72 = por %p70, %p71
    %p73 = scmp.ne.s32.totalorder %s65, %s68
    %p74 = scmp.eq.s32.totalorder %s8, 0
    %p75 = por %p73, %p74
    %p76 = scmp.ne.s32.totalorder %s65, %s68
    %p77 = scmp.eq.s32.totalorder %s13, 1
    %p78 = por %p76, %p77
    %p79 = scmp.ne.s32.totalorder %s68, %s69
    %p80 = scmp.eq.s32.totalorder %s13, 0
    %p81 = por %p79, %p80
    %p82 = scmp.ne.s32.totalorder %s68, %s69
    %p83 = scmp.eq.s32.totalorder %s14, 1
    %p84 = por %p82, %p83
    %p86 = scmp.ne.s32.totalorder %s69, %s85
    %p87 = scmp.eq.s32.totalorder %s14, 0
    %p88 = por %p86, %p87
    %p89 = scmp.le.s32.totalorder 1, %s8
    %p90 = scmp.lt.s32.totalorder %s8, 3
    %p91 = pnand %p89, %p90
    %p92 = pneg %p91
    // Predicated region
    $region9: #{maxpool3d_2x2x2.1} parent=5 // pred_check
      _
    $region10: #{maxpool3d_2x2x2.1} parent=5 // pred_check_branch
      %94 = sbr.rel (%p91) target = $region12
    $region11: #{maxpool3d_2x2x2.1} parent=5 // pred_region
      %s95 = ssub.s32 %s8, 1
      // Predicated region
      $region13: #{maxpool3d_2x2x2.1} parent=11 // pred_check
        %p96 = pneg %p55
      $region14: #{maxpool3d_2x2x2.1} parent=11 // pred_check_branch
        %98 = sbr.rel (%p96) target = $region16
      $region15: #{maxpool3d_2x2x2.1} parent=11 // pred_region
        _
      $region16: #{maxpool3d_2x2x2.1} parent=11 // pred_fallthru
        _
    $region12: #{maxpool3d_2x2x2.1} parent=5 // pred_fallthru
      _
    %p99 = scmp.lt.s32.totalorder %s8, 2
    // Predicated region
    $region17: #{maxpool3d_2x2x2.1} parent=5 // pred_check
      %p100 = pneg %p99
    $region18: #{maxpool3d_2x2x2.1} parent=5 // pred_check_branch
      %102 = sbr.rel (%p100) target = $region20
    $region19: #{maxpool3d_2x2x2.1} parent=5 // pred_region
      // Predicated region
      $region21: #{maxpool3d_2x2x2.1} parent=19 // pred_check
        %p103 = pneg %p28
      $region22: #{maxpool3d_2x2x2.1} parent=19 // pred_check_branch
        %105 = sbr.rel (%p103) target = $region24
      $region23: #{maxpool3d_2x2x2.1} parent=19 // pred_region
        %s106 = smul.u32 4, %s8
        %p107 = scmp.lt.s32.totalorder %s106, 7
        %s108 = scalar_select %p107, %s106, 7
        %s109 = smul.addr %s108, 8
        %s110 = smul.addr %s109, 8
        %s111 = scalar_lea.vmem %s0, %s110
        %s112 = smul.u32 4, %s8
      $region24: #{maxpool3d_2x2x2.1} parent=19 // pred_fallthru
        _
    $region20: #{maxpool3d_2x2x2.1} parent=5 // pred_fallthru
      _
    %p113 = scmp.le.s32.totalorder 1, %s8
    %p114 = scmp.lt.s32.totalorder %s8, 3
    %p115 = pnand %p113, %p114
    %p116 = pneg %p115
    // Predicated region
    $region25: #{maxpool3d_2x2x2.1} parent=5 // pred_check
      _
    $region26: #{maxpool3d_2x2x2.1} parent=5 // pred_check_branch
      %118 = sbr.rel (%p115) target = $region28
    $region27: #{maxpool3d_2x2x2.1} parent=5 // pred_region
      %s119 = ssub.s32 %s8, 1
      %s120 = smul.u32 4, %s13
      %p121 = scmp.lt.s32.totalorder %s120, 7
      %s122 = scalar_select %p121, %s120, 7
      %s123 = smul.addr %s122, 8
      %s124 = smul.addr %s123, 8
      %s125 = scalar_lea.vmem %s0, %s124
      %p126 = pneg %p34
      %p127 = pneg %p31
      %p128 = pneg %p55
      %p129 = pneg %p52
      %p130 = pneg %p81
      %p131 = pneg %p78
      %s132 = smul.u32 4, %s13
      %p133 = scmp.lt.s32.totalorder %s132, 7
      %s134 = scalar_select %p133, %s132, 7
      %s135 = smul.addr %s134, 8
      %s136 = scalar_lea.vmem %s2, %s135
      %s137 = smul.u32 4, %s13
      %p138 = scmp.lt.s32.totalorder %s137, 7
      %s139 = scalar_select %p138, %s137, 7
      %s140 = smul.addr %s139, 8
      %s141 = smul.addr %s140, 8
      %s142 = scalar_lea.vmem %s0, %s141
      %s143 = smul.u32 4, %s13
      %s144 = smul.u32 4, %s13
      %p145 = scmp.lt.s32.totalorder %s144, 7
      %s146 = scalar_select %p145, %s144, 7
      %s147 = smul.addr %s146, 8
      %s148 = scalar_lea.vmem %s2, %s147
      %s149 = smul.u32 4, %s13
      %v150 = vld [vmem:[%s142] sm:$0xff]
      %v151 = vld [vmem:[%s142 + $0x8] sm:$0xff]
      %v152 = vld [vmem:[%s142 + $0x10] sm:$0xff]
      %v153 = vld [vmem:[%s142 + $0x18] sm:$0xff]
      %v154 = vld [vmem:[%s142 + $0x20] sm:$0xff]
      %v155 = vld [vmem:[%s142 + $0x28] sm:$0xff]
      %v156 = vld [vmem:[%s142 + $0x30] sm:$0xff]
      %v157 = vld [vmem:[%s142 + $0x38] sm:$0xff]
      %v158 = vld [vmem:[%s142 + $0x40] sm:$0xff]
      %v159 = vld [vmem:[%s142 + $0x48] sm:$0xff]
      %v160 = vld [vmem:[%s142 + $0x50] sm:$0xff]
      %v161 = vld [vmem:[%s142 + $0x58] sm:$0xff]
      %v162 = vld [vmem:[%s142 + $0x60] sm:$0xff]
      %v163 = vld [vmem:[%s142 + $0x68] sm:$0xff]
      %v164 = vld [vmem:[%s142 + $0x70] sm:$0xff]
      %v165 = vld [vmem:[%s142 + $0x78] sm:$0xff]
      %v166 = vld [vmem:[%s142 + $0x80] sm:$0xff]
      %v167 = vld [vmem:[%s142 + $0x88] sm:$0xff]
      %v168 = vld [vmem:[%s142 + $0x90] sm:$0xff]
      %v169 = vld [vmem:[%s142 + $0x98] sm:$0xff]
      %v170 = vld [vmem:[%s142 + $0xa0] sm:$0xff]
      %v171 = vld [vmem:[%s142 + $0xa8] sm:$0xff]
      %v172 = vld [vmem:[%s142 + $0xb0] sm:$0xff]
      %v173 = vld [vmem:[%s142 + $0xb8] sm:$0xff]
      %v174 = vld [vmem:[%s142 + $0xc0] sm:$0xff]
      %v175 = vld [vmem:[%s142 + $0xc8] sm:$0xff]
      %v176 = vld [vmem:[%s142 + $0xd0] sm:$0xff]
      %v177 = vld [vmem:[%s142 + $0xd8] sm:$0xff]
      %v178 = vld [vmem:[%s142 + $0xe0] sm:$0xff]
      %v179 = vld [vmem:[%s142 + $0xe8] sm:$0xff]
      %v180 = vld [vmem:[%s142 + $0xf0] sm:$0xff]
      %v181 = vld [vmem:[%s142 + $0xf8] sm:$0xff]
      %v182 = vmax.f32 %v150, %v154
      %v183 = vmax.f32 %v151, %v155
      %v184 = vmax.f32 %v152, %v156
      %v185 = vmax.f32 %v153, %v157
      %v186 = vmax.f32 %v158, %v162
      %v187 = vmax.f32 %v159, %v163
      %v188 = vmax.f32 %v160, %v164
      %v189 = vmax.f32 %v161, %v165
      %v190 = vmax.f32 %v166, %v170
      %v191 = vmax.f32 %v167, %v171
      %v192 = vmax.f32 %v168, %v172
      %v193 = vmax.f32 %v169, %v173
      %v194 = vmax.f32 %v174, %v178
      %v195 = vmax.f32 %v175, %v179
      %v196 = vmax.f32 %v176, %v180
      %v197 = vmax.f32 %v177, %v181
      %198 = vrot.lane.b32.xlu0 %v182, 127
      %v199 = vpop.permute.xlu0 %198
      %200 = vrot.lane.b32.xlu0 %v186, 127
      %v201 = vpop.permute.xlu0 %200
      %202 = vrot.lane.b32.xlu0 %v190, 127
      %v203 = vpop.permute.xlu0 %202
      %204 = vrot.lane.b32.xlu0 %v194, 127
      %v205 = vpop.permute.xlu0 %204
      %206 = vrot.lane.b32.xlu0 %v183, 127
      %v207 = vpop.permute.xlu0 %206
      %208 = vrot.lane.b32.xlu0 %v187, 127
      %v209 = vpop.permute.xlu0 %208
      %210 = vrot.lane.b32.xlu0 %v191, 127
      %v211 = vpop.permute.xlu0 %210
      %212 = vrot.lane.b32.xlu0 %v195, 127
      %v213 = vpop.permute.xlu0 %212
      %214 = vrot.lane.b32.xlu0 %v184, 127
      %v215 = vpop.permute.xlu0 %214
      %216 = vrot.lane.b32.xlu0 %v188, 127
      %v217 = vpop.permute.xlu0 %216
      %218 = vrot.lane.b32.xlu0 %v192, 127
      %v219 = vpop.permute.xlu0 %218
      %220 = vrot.lane.b32.xlu0 %v196, 127
      %v221 = vpop.permute.xlu0 %220
      %222 = vrot.lane.b32.xlu0 %v185, 127
      %v223 = vpop.permute.xlu0 %222
      %224 = vrot.lane.b32.xlu0 %v189, 127
      %v225 = vpop.permute.xlu0 %224
      %226 = vrot.lane.b32.xlu0 %v193, 127
      %v227 = vpop.permute.xlu0 %226
      %228 = vrot.lane.b32.xlu0 %v197, 127
      %v229 = vpop.permute.xlu0 %228
      %v230 = vlaneseq
      %v231 = vand.u32 %v230, 127
      %vm232 = vcmp.lt.s32.totalorder %v231, 127
      %v233 = vsel %vm232, %v215, %v223
      %v234 = vsel %vm232, %v217, %v225
      %v235 = vsel %vm232, %v219, %v227
      %v236 = vsel %vm232, %v221, %v229
      %v237 = vsel %vm232, %v207, %v215
      %v238 = vsel %vm232, %v209, %v217
      %v239 = vsel %vm232, %v211, %v219
      %v240 = vsel %vm232, %v213, %v221
      %v241 = vsel %vm232, %v199, %v207
      %v242 = vsel %vm232, %v201, %v209
      %v243 = vsel %vm232, %v203, %v211
      %v244 = vsel %vm232, %v205, %v213
      %v245 = vsel %vm232, %v223, %v199
      %v246 = vsel %vm232, %v225, %v201
      %v247 = vsel %vm232, %v227, %v203
      %v248 = vsel %vm232, %v229, %v205
      %v249 = vmax.f32 %v182, %v241
      %v250 = vmax.f32 %v183, %v237
      %v251 = vmax.f32 %v184, %v233
      %v252 = vmax.f32 %v185, %v245
      %v253 = vmax.f32 %v186, %v242
      %v254 = vmax.f32 %v187, %v238
      %v255 = vmax.f32 %v188, %v234
      %v256 = vmax.f32 %v189, %v246
      %v257 = vmax.f32 %v190, %v243
      %v258 = vmax.f32 %v191, %v239
      %v259 = vmax.f32 %v192, %v235
      %v260 = vmax.f32 %v193, %v247
      %v261 = vmax.f32 %v194, %v244
      %v262 = vmax.f32 %v195, %v240
      %v263 = vmax.f32 %v196, %v236
      %v264 = vmax.f32 %v197, %v248
      %265 = vrot.lane.b32.xlu0 %v249, 96
      %v266 = vpop.permute.xlu0 %265
      %267 = vrot.lane.b32.xlu0 %v253, 96
      %v268 = vpop.permute.xlu0 %267
      %269 = vrot.lane.b32.xlu0 %v257, 96
      %v270 = vpop.permute.xlu0 %269
      %271 = vrot.lane.b32.xlu0 %v261, 96
      %v272 = vpop.permute.xlu0 %271
      %273 = vrot.lane.b32.xlu0 %v250, 96
      %v274 = vpop.permute.xlu0 %273
      %275 = vrot.lane.b32.xlu0 %v254, 96
      %v276 = vpop.permute.xlu0 %275
      %277 = vrot.lane.b32.xlu0 %v258, 96
      %v278 = vpop.permute.xlu0 %277
      %279 = vrot.lane.b32.xlu0 %v262, 96
      %v280 = vpop.permute.xlu0 %279
      %281 = vrot.lane.b32.xlu0 %v251, 96
      %v282 = vpop.permute.xlu0 %281
      %283 = vrot.lane.b32.xlu0 %v255, 96
      %v284 = vpop.permute.xlu0 %283
      %285 = vrot.lane.b32.xlu0 %v259, 96
      %v286 = vpop.permute.xlu0 %285
      %287 = vrot.lane.b32.xlu0 %v263, 96
      %v288 = vpop.permute.xlu0 %287
      %289 = vrot.lane.b32.xlu0 %v252, 96
      %v290 = vpop.permute.xlu0 %289
      %291 = vrot.lane.b32.xlu0 %v256, 96
      %v292 = vpop.permute.xlu0 %291
      %293 = vrot.lane.b32.xlu0 %v260, 96
      %v294 = vpop.permute.xlu0 %293
      %295 = vrot.lane.b32.xlu0 %v264, 96
      %v296 = vpop.permute.xlu0 %295
      %vm297 = vcmp.lt.s32.totalorder %v231, 96
      %v298 = vsel %vm297, %v282, %v290
      %v299 = vsel %vm297, %v284, %v292
      %v300 = vsel %vm297, %v286, %v294
      %v301 = vsel %vm297, %v288, %v296
      %v302 = vsel %vm297, %v274, %v282
      %v303 = vsel %vm297, %v276, %v284
      %v304 = vsel %vm297, %v278, %v286
      %v305 = vsel %vm297, %v280, %v288
      %v306 = vsel %vm297, %v266, %v274
      %v307 = vsel %vm297, %v268, %v276
      %v308 = vsel %vm297, %v270, %v278
      %v309 = vsel %vm297, %v272, %v280
      %v310 = vsel %vm297, %v290, %v266
      %v311 = vsel %vm297, %v292, %v268
      %v312 = vsel %vm297, %v294, %v270
      %v313 = vsel %vm297, %v296, %v272
      %v314 = vmax.f32 %v249, %v306
      %v315 = vmax.f32 %v250, %v302
      %v316 = vmax.f32 %v251, %v298
      %v317 = vmax.f32 %v252, %v310
      %v318 = vmax.f32 %v253, %v307
      %v319 = vmax.f32 %v254, %v303
      %v320 = vmax.f32 %v255, %v299
      %v321 = vmax.f32 %v256, %v311
      %v322 = vmax.f32 %v257, %v308
      %v323 = vmax.f32 %v258, %v304
      %v324 = vmax.f32 %v259, %v300
      %v325 = vmax.f32 %v260, %v312
      %v326 = vmax.f32 %v261, %v309
      %v327 = vmax.f32 %v262, %v305
      %v328 = vmax.f32 %v263, %v301
      %v329 = vmax.f32 %v264, %v313
      %v330 = vld [vmem:[%s1] sm:$0xff]
      %v331 = vld [vmem:[%s1 + $0x8] sm:$0xff]
      %v332 = vld [vmem:[%s1 + $0x10] sm:$0xff]
      %v333 = vld [vmem:[%s1 + $0x18] sm:$0xff]
      %v334 = vld [vmem:[%s1 + $0x20] sm:$0xff]
      %v335 = vld [vmem:[%s1 + $0x28] sm:$0xff]
      %v336 = vld [vmem:[%s1 + $0x30] sm:$0xff]
      %v337 = vld [vmem:[%s1 + $0x38] sm:$0xff]
      %v338 = vld [vmem:[%s1 + $0x40] sm:$0xff]
      %v339 = vld [vmem:[%s1 + $0x48] sm:$0xff]
      %v340 = vld [vmem:[%s1 + $0x50] sm:$0xff]
      %v341 = vld [vmem:[%s1 + $0x58] sm:$0xff]
      %v342 = vld [vmem:[%s1 + $0x60] sm:$0xff]
      %v343 = vld [vmem:[%s1 + $0x68] sm:$0xff]
      %v344 = vld [vmem:[%s1 + $0x70] sm:$0xff]
      %v345 = vld [vmem:[%s1 + $0x78] sm:$0xff]
      %v346 = vld [vmem:[%s1 + $0x80] sm:$0xff]
      %v347 = vld [vmem:[%s1 + $0x88] sm:$0xff]
      %v348 = vld [vmem:[%s1 + $0x90] sm:$0xff]
      %v349 = vld [vmem:[%s1 + $0x98] sm:$0xff]
      %v350 = vld [vmem:[%s1 + $0xa0] sm:$0xff]
      %v351 = vld [vmem:[%s1 + $0xa8] sm:$0xff]
      %v352 = vld [vmem:[%s1 + $0xb0] sm:$0xff]
      %v353 = vld [vmem:[%s1 + $0xb8] sm:$0xff]
      %v354 = vld [vmem:[%s1 + $0xc0] sm:$0xff]
      %v355 = vld [vmem:[%s1 + $0xc8] sm:$0xff]
      %v356 = vld [vmem:[%s1 + $0xd0] sm:$0xff]
      %v357 = vld [vmem:[%s1 + $0xd8] sm:$0xff]
      %v358 = vld [vmem:[%s1 + $0xe0] sm:$0xff]
      %v359 = vld [vmem:[%s1 + $0xe8] sm:$0xff]
      %v360 = vld [vmem:[%s1 + $0xf0] sm:$0xff]
      %v361 = vld [vmem:[%s1 + $0xf8] sm:$0xff]
      %v362 = vld [vmem:[%s1 + $0x100] sm:$0xff]
      %v363 = vld [vmem:[%s1 + $0x108] sm:$0xff]
      %v364 = vld [vmem:[%s1 + $0x110] sm:$0xff]
      %v365 = vld [vmem:[%s1 + $0x118] sm:$0xff]
      %v366 = vld [vmem:[%s1 + $0x120] sm:$0xff]
      %v367 = vld [vmem:[%s1 + $0x128] sm:$0xff]
      %v368 = vld [vmem:[%s1 + $0x130] sm:$0xff]
      %v369 = vld [vmem:[%s1 + $0x138] sm:$0xff]
      %v370 = vld [vmem:[%s1 + $0x140] sm:$0xff]
      %v371 = vld [vmem:[%s1 + $0x148] sm:$0xff]
      %v372 = vld [vmem:[%s1 + $0x150] sm:$0xff]
      %v373 = vld [vmem:[%s1 + $0x158] sm:$0xff]
      %v374 = vld [vmem:[%s1 + $0x160] sm:$0xff]
      %v375 = vld [vmem:[%s1 + $0x168] sm:$0xff]
      %v376 = vld [vmem:[%s1 + $0x170] sm:$0xff]
      %v377 = vld [vmem:[%s1 + $0x178] sm:$0xff]
      %v378 = vld [vmem:[%s1 + $0x180] sm:$0xff]
      %v379 = vld [vmem:[%s1 + $0x188] sm:$0xff]
      %v380 = vld [vmem:[%s1 + $0x190] sm:$0xff]
      %v381 = vld [vmem:[%s1 + $0x198] sm:$0xff]
      %v382 = vld [vmem:[%s1 + $0x1a0] sm:$0xff]
      %v383 = vld [vmem:[%s1 + $0x1a8] sm:$0xff]
      %v384 = vld [vmem:[%s1 + $0x1b0] sm:$0xff]
      %v385 = vld [vmem:[%s1 + $0x1b8] sm:$0xff]
      %v386 = vld [vmem:[%s1 + $0x1c0] sm:$0xff]
      %v387 = vld [vmem:[%s1 + $0x1c8] sm:$0xff]
      %v388 = vld [vmem:[%s1 + $0x1d0] sm:$0xff]
      %v389 = vld [vmem:[%s1 + $0x1d8] sm:$0xff]
      %v390 = vld [vmem:[%s1 + $0x1e0] sm:$0xff]
      %v391 = vld [vmem:[%s1 + $0x1e8] sm:$0xff]
      %v392 = vld [vmem:[%s1 + $0x1f0] sm:$0xff]
      %v393 = vld [vmem:[%s1 + $0x1f8] sm:$0xff]
      %394 = vmatprep.subr.mxu0 0.0
      %395 = vmatpush1.msra.mxu0 %v330
      %396 = vmatprep.subr.mxu0 0.0
      %397 = vmatpush1.msra.mxu0 %v331
      %398 = vmatprep.subr.mxu0 0.0
      %399 = vmatpush1.msra.mxu0 %v332
      %400 = vmatprep.subr.mxu0 0.0
      %401 = vmatpush1.msra.mxu0 %v333
      %402 = vmatprep.subr.mxu0 0.0
      %403 = vmatpush1.msra.mxu0 %v334
      %404 = vmatprep.subr.mxu0 0.0
      %405 = vmatpush1.msra.mxu0 %v335
      %406 = vmatprep.subr.mxu0 0.0
      %407 = vmatpush1.msra.mxu0 %v336
      %408 = vmatprep.subr.mxu0 0.0
      %409 = vmatpush1.msra.mxu0 %v337
      %410 = vmatprep.subr.mxu0 0.0
      %411 = vmatpush1.msra.mxu0 %v338
      %412 = vmatprep.subr.mxu0 0.0
      %413 = vmatpush1.msra.mxu0 %v339
      %414 = vmatprep.subr.mxu0 0.0
      %415 = vmatpush1.msra.mxu0 %v340
      %416 = vmatprep.subr.mxu0 0.0
      %417 = vmatpush1.msra.mxu0 %v341
      %418 = vmatprep.subr.mxu0 0.0
      %419 = vmatpush1.msra.mxu0 %v342
      %420 = vmatprep.subr.mxu0 0.0
      %421 = vmatpush1.msra.mxu0 %v343
      %422 = vmatprep.subr.mxu0 0.0
      %423 = vmatpush1.msra.mxu0 %v344
      %424 = vmatprep.subr.mxu0 0.0
      %425 = vmatpush1.msra.mxu0 %v345
      %426 = vmatprep.subr.mxu0 0.0
      %427 = vmatpush1.msra.mxu0 %v346
      %428 = vmatprep.subr.mxu0 0.0
      %429 = vmatpush1.msra.mxu0 %v347
      %430 = vmatprep.subr.mxu0 0.0
      %431 = vmatpush1.msra.mxu0 %v348
      %432 = vmatprep.subr.mxu0 0.0
      %433 = vmatpush1.msra.mxu0 %v349
      %434 = vmatprep.subr.mxu0 0.0
      %435 = vmatpush1.msra.mxu0 %v350
      %436 = vmatprep.subr.mxu0 0.0
      %437 = vmatpush1.msra.mxu0 %v351
      %438 = vmatprep.subr.mxu0 0.0
      %439 = vmatpush1.msra.mxu0 %v352
      %440 = vmatprep.subr.mxu0 0.0
      %441 = vmatpush1.msra.mxu0 %v353
      %442 = vmatprep.subr.mxu0 0.0
      %443 = vmatpush1.msra.mxu0 %v354
      %444 = vmatprep.subr.mxu0 0.0
      %445 = vmatpush1.msra.mxu0 %v355
      %446 = vmatprep.subr.mxu0 0.0
      %447 = vmatpush1.msra.mxu0 %v356
      %448 = vmatprep.subr.mxu0 0.0
      %449 = vmatpush1.msra.mxu0 %v357
      %450 = vmatprep.subr.mxu0 0.0
      %451 = vmatpush1.msra.mxu0 %v358
      %452 = vmatprep.subr.mxu0 0.0
      %453 = vmatpush1.msra.mxu0 %v359
      %454 = vmatprep.subr.mxu0 0.0
      %455 = vmatpush1.msra.mxu0 %v360
      %456 = vmatprep.subr.mxu0 0.0
      %457 = vmatpush1.msra.mxu0 %v361
      %458 = vmatprep.mubr.f32.mxu0 %v315
      %459 = vmatmul.mubr.f32.gmra.mrb[0].mxu0 %v314
      %v460 = vpop.f32.mrb[0].mxu0
      %v461 = vadd.f32 0.0, %v460
      %v462 = vpop.f32.mrb[0].mxu0
      %463 = vmatprep.mubr.f32.mxu0 %v319
      %464 = vmatmul.mubr.f32.gmra.mrb[0].mxu0 %v318
      %v465 = vpop.f32.mrb[0].mxu0
      %v466 = vadd.f32 0.0, %v465
      %v467 = vpop.f32.mrb[0].mxu0
      %468 = vmatprep.mubr.f32.mxu0 %v323
      %469 = vmatmul.mubr.f32.gmra.mrb[0].mxu0 %v322
      %v470 = vpop.f32.mrb[0].mxu0
      %v471 = vadd.f32 0.0, %v470
      %v472 = vpop.f32.mrb[0].mxu0
      %473 = vmatprep.mubr.f32.mxu0 %v327
      %474 = vmatmul.mubr.f32.gmra.mrb[0].mxu0 %v326
      %v475 = vpop.f32.mrb[0].mxu0
      %v476 = vadd.f32 0.0, %v475
      %v477 = vpop.f32.mrb[0].mxu0
      %478 = vdwg.mxu0
      %479 = vmatprep.subr.mxu0 0.0
      %480 = vmatpush1.msra.mxu0 %v362
      %481 = vmatprep.subr.mxu0 0.0
      %482 = vmatpush1.msra.mxu0 %v363
      %483 = vmatprep.subr.mxu0 0.0
      %484 = vmatpush1.msra.mxu0 %v364
      %485 = vmatprep.subr.mxu0 0.0
      %486 = vmatpush1.msra.mxu0 %v365
      %487 = vmatprep.subr.mxu0 0.0
      %488 = vmatpush1.msra.mxu0 %v366
      %489 = vmatprep.subr.mxu0 0.0
      %490 = vmatpush1.msra.mxu0 %v367
      %491 = vmatprep.subr.mxu0 0.0
      %492 = vmatpush1.msra.mxu0 %v368
      %493 = vmatprep.subr.mxu0 0.0
      %494 = vmatpush1.msra.mxu0 %v369
      %495 = vmatprep.subr.mxu0 0.0
      %496 = vmatpush1.msra.mxu0 %v370
      %497 = vmatprep.subr.mxu0 0.0
      %498 = vmatpush1.msra.mxu0 %v371
      %499 = vmatprep.subr.mxu0 0.0
      %500 = vmatpush1.msra.mxu0 %v372
      %501 = vmatprep.subr.mxu0 0.0
      %502 = vmatpush1.msra.mxu0 %v373
      %503 = vmatprep.subr.mxu0 0.0
      %504 = vmatpush1.msra.mxu0 %v374
      %505 = vmatprep.subr.mxu0 0.0
      %506 = vmatpush1.msra.mxu0 %v375
      %507 = vmatprep.subr.mxu0 0.0
      %508 = vmatpush1.msra.mxu0 %v376
      %509 = vmatprep.subr.mxu0 0.0
      %510 = vmatpush1.msra.mxu0 %v377
      %511 = vmatprep.subr.mxu0 0.0
      %512 = vmatpush1.msra.mxu0 %v378
      %513 = vmatprep.subr.mxu0 0.0
      %514 = vmatpush1.msra.mxu0 %v379
      %515 = vmatprep.subr.mxu0 0.0
      %516 = vmatpush1.msra.mxu0 %v380
      %517 = vmatprep.subr.mxu0 0.0
      %518 = vmatpush1.msra.mxu0 %v381
      %519 = vmatprep.subr.mxu0 0.0
      %520 = vmatpush1.msra.mxu0 %v382
      %521 = vmatprep.subr.mxu0 0.0
      %522 = vmatpush1.msra.mxu0 %v383
      %523 = vmatprep.subr.mxu0 0.0
      %524 = vmatpush1.msra.mxu0 %v384
      %525 = vmatprep.subr.mxu0 0.0
      %526 = vmatpush1.msra.mxu0 %v385
      %527 = vmatprep.subr.mxu0 0.0
      %528 = vmatpush1.msra.mxu0 %v386
      %529 = vmatprep.subr.mxu0 0.0
      %530 = vmatpush1.msra.mxu0 %v387
      %531 = vmatprep.subr.mxu0 0.0
      %532 = vmatpush1.msra.mxu0 %v388
      %533 = vmatprep.subr.mxu0 0.0
      %534 = vmatpush1.msra.mxu0 %v389
      %535 = vmatprep.subr.mxu0 0.0
      %536 = vmatpush1.msra.mxu0 %v390
      %537 = vmatprep.subr.mxu0 0.0
      %538 = vmatpush1.msra.mxu0 %v391
      %539 = vmatprep.subr.mxu0 0.0
      %540 = vmatpush1.msra.mxu0 %v392
      %541 = vmatprep.subr.mxu0 0.0
      %542 = vmatpush1.msra.mxu0 %v393
      %543 = vmatprep.mubr.f32.mxu0 %v317
      %544 = vmatmul.mubr.f32.gmra.mrb[0].mxu0 %v316
      %v545 = vpop.f32.mrb[0].mxu0
      %v546 = vadd.f32 %v461, %v545
      %v547 = vpop.f32.mrb[0].mxu0
      %548 = vmatprep.mubr.f32.mxu0 %v321
      %549 = vmatmul.mubr.f32.gmra.mrb[0].mxu0 %v320
      %v550 = vpop.f32.mrb[0].mxu0
      %v551 = vadd.f32 %v466, %v550
      %v552 = vpop.f32.mrb[0].mxu0
      %553 = vmatprep.mubr.f32.mxu0 %v325
      %554 = vmatmul.mubr.f32.gmra.mrb[0].mxu0 %v324
      %v555 = vpop.f32.mrb[0].mxu0
      %v556 = vadd.f32 %v471, %v555
      %v557 = vpop.f32.mrb[0].mxu0
      %558 = vmatprep.mubr.f32.mxu0 %v329
      %559 = vmatmul.mubr.f32.gmra.mrb[0].mxu0 %v328
      %v560 = vpop.f32.mrb[0].mxu0
      %v561 = vadd.f32 %v476, %v560
      %v562 = vpop.f32.mrb[0].mxu0
      %563 = vdwg.mxu0
      %564 = vst [vmem:[%s148] sm:$0xff] %v546
      %565 = vst [vmem:[%s148 + $0x8] sm:$0xff] %v551
      %566 = vst [vmem:[%s148 + $0x10] sm:$0xff] %v556
      %567 = vst [vmem:[%s148 + $0x18] sm:$0xff] %v561
      %s568 = smul.u32 4, %s13
      %p569 = scmp.lt.s32.totalorder %s568, 7
      %s570 = scalar_select %p569, %s568, 7
      %s571 = smul.addr %s570, 8
      %s572 = scalar_lea.vmem %s2, %s571
      // Predicated region
      $region29: #{maxpool3d_2x2x2.1} parent=27 // pred_check
        %p573 = pneg %p78
      $region30: #{maxpool3d_2x2x2.1} parent=27 // pred_check_branch
        %575 = sbr.rel (%p573) target = $region32
      $region31: #{maxpool3d_2x2x2.1} parent=27 // pred_region
        %s576 = smul.u32 4, %s13
      $region32: #{maxpool3d_2x2x2.1} parent=27 // pred_fallthru
        _
    $region28: #{maxpool3d_2x2x2.1} parent=5 // pred_fallthru
      _
    %p577 = scmp.le.s32.totalorder 2, %s8
    // Predicated region
    $region33: #{maxpool3d_2x2x2.1} parent=5 // pred_check
      %p578 = pneg %p577
    $region34: #{maxpool3d_2x2x2.1} parent=5 // pred_check_branch
      %580 = sbr.rel (%p578) target = $region36
    $region35: #{maxpool3d_2x2x2.1} parent=5 // pred_region
      %s581 = ssub.s32 %s8, 2
      // Predicated region
      $region37: #{maxpool3d_2x2x2.1} parent=35 // pred_check
        %p582 = pneg %p84
      $region38: #{maxpool3d_2x2x2.1} parent=35 // pred_check_branch
        %584 = sbr.rel (%p582) target = $region40
      $region39: #{maxpool3d_2x2x2.1} parent=35 // pred_region
        %s585 = smul.u32 4, %s14
        %p586 = scmp.lt.s32.totalorder %s585, 7
        %s587 = scalar_select %p586, %s585, 7
        %s588 = smul.addr %s587, 8
        %s589 = scalar_lea.vmem %s2, %s588
      $region40: #{maxpool3d_2x2x2.1} parent=35 // pred_fallthru
        _
    $region36: #{maxpool3d_2x2x2.1} parent=5 // pred_fallthru
      _
  $region6: #{maxpool3d_2x2x2.1} parent=0 // loop_footer
    %s12 = sadd.s32 1, %s8
  $region7: #{maxpool3d_2x2x2.1} parent=0 // loop_footer_branch
    %7 = sbr.rel target = $region3
  $region8: #{maxpool3d_2x2x2.1} parent=0 // loop_exit
    _

</llo_original>
